<compile_context>
chip_gen: v5e
topology: v5e:2x2
jax: 0.10.0
libtpu: 0.0.40
codegen_flags: <defaults>
</compile_context>

<pallas_src>
import functools

import jax
import jax.numpy as jnp
from jax.experimental import pallas as pl
from jax.experimental.pallas import tpu as pltpu

H_IN = 768    # in_features of the Dense head (fixed by the module)
H_OUT = 512   # out_features of the Dense head (fixed by the module)


def _round_up(x, m):
    return (x + m - 1) // m * m


def _head_kernel(emb_ref, mask_ref, cnt_ref, w_ref, b_ref, o_ref, sum_ref, *,
                 seq_len, tile_s):
    # emb_ref : (TB, TS, H_IN)  token-embedding tile (native dtype, e.g. bf16)
    # mask_ref: (TB, TS, 1)     attention-mask tile (1 = real token, 0 = padding), bf16
    # cnt_ref : (TB, 1)         precomputed mask counts (f32, exact)
    # w_ref   : (H_IN, H_OUT)   dense weight (resident, x @ W layout)
    # b_ref   : (1, H_OUT)      dense bias (resident)
    # o_ref   : (TB, H_OUT)     sentence embeddings for this batch tile
    # sum_ref : (TB, H_IN)      VMEM f32 accumulator for the masked sum over S
    si = pl.program_id(1)

    @pl.when(si == 0)
    def _():
        sum_ref[...] = jnp.zeros_like(sum_ref)

    emb = emb_ref[...]                                    # (TB, TS, H_IN), native dtype
    keep = mask_ref[...] > 0                              # (TB, TS, 1) bool; mask is exactly 0/1

    if seq_len % tile_s != 0:
        # Ragged S tail: OOB sublanes of the last tile hold undefined data. Gate them inside the
        # select condition (never multiply by 0) so garbage / NaN cannot reach the accumulator.
        s_pos = jax.lax.broadcasted_iota(jnp.int32, (1, tile_s, 1), 1) + si * tile_s
        keep = jnp.logical_and(keep, s_pos < seq_len)

    # Masked partial sum for this S tile; select (mask is 0/1 so select == multiply) then
    # accumulate in f32 regardless of the streaming dtype.
    masked = jnp.where(keep, emb, jnp.zeros((), emb.dtype)).astype(jnp.float32)
    sum_ref[...] += jnp.sum(masked, axis=1)

    @pl.when(si == pl.num_programs(1) - 1)
    def _():
        # SentenceTransformer "mean" pooling: clamp(min=1e-9) on the denominator.
        denom = jnp.maximum(cnt_ref[...], 1e-9)           # (TB, 1)
        pooled = sum_ref[...] / denom                     # (TB, H_IN) f32
        # Dense(768 -> 512) + Tanh (sentence_transformers.models.Dense default activation).
        logits = jnp.dot(pooled, w_ref[...],
                         preferred_element_type=jnp.float32) + b_ref[...]
        o_ref[...] = jnp.tanh(logits).astype(o_ref.dtype)


def language_embeddings_head(token_emb, attn_mask, w, b, *, tb=8, ts=None):
    B, S, H = token_emb.shape
    assert H == H_IN and w.shape == (H_IN, H_OUT)

    # Tile sizes: TB=8 keeps >=2 batch blocks for TensorCore sharding on v7x; TS sized for
    # 6-12 MiB per double-buffered embedding tile (bigger tiles amortize the ~0.35us/step cost).
    if ts is None:
        ts = 1024 if token_emb.dtype.itemsize <= 2 else 512
    TB = min(tb, B)
    TS = min(ts, _round_up(S, 8))

    # Tiny wrapper-side helpers (negligible HBM traffic vs. the [B,S,768] stream):
    #  - mask as (B, S, 1) bf16: lane-broadcast against the hidden axis is cheap, 0/1 exact in bf16
    #  - exact token counts for the pooling denominator, so the kernel needs no second reduce.
    mask3 = attn_mask.reshape(B, S, 1).astype(jnp.bfloat16)
    counts = jnp.sum(attn_mask.astype(jnp.float32), axis=1, keepdims=True)   # (B, 1)

    grid = (pl.cdiv(B, TB), pl.cdiv(S, TS))   # B outer (parallel), S inner (reduction, last)

    emb_bytes = token_emb.size * token_emb.dtype.itemsize
    cost = pl.CostEstimate(
        flops=2 * B * S * H_IN + 2 * B * H_IN * H_OUT,
        transcendentals=B * H_OUT,
        bytes_accessed=emb_bytes + mask3.size * 2 + counts.size * 4
        + (H_IN * H_OUT + H_OUT + B * H_OUT) * 4,
    )

    kernel = functools.partial(_head_kernel, seq_len=S, tile_s=TS)

    return pl.pallas_call(
        kernel,
        out_shape=jax.ShapeDtypeStruct((B, H_OUT), jnp.float32),
        grid_spec=pltpu.PrefetchScalarGridSpec(
            num_scalar_prefetch=0,
            grid=grid,
            in_specs=[
                pl.BlockSpec((TB, TS, H_IN), lambda bi, si: (bi, si, 0)),
                pl.BlockSpec((TB, TS, 1), lambda bi, si: (bi, si, 0)),
                pl.BlockSpec((TB, 1), lambda bi, si: (bi, 0)),
                pl.BlockSpec((H_IN, H_OUT), lambda bi, si: (0, 0)),   # resident weight
                pl.BlockSpec((1, H_OUT), lambda bi, si: (0, 0)),      # resident bias
            ],
            out_specs=pl.BlockSpec((TB, H_OUT), lambda bi, si: (bi, 0)),
            scratch_shapes=[
                pltpu.VMEM((TB, H_IN), jnp.float32),   # f32 masked-sum accumulator
            ],
        ),
        compiler_params=pltpu.CompilerParams(
            dimension_semantics=("parallel", "arbitrary"),
            vmem_limit_bytes=48 * 1024 * 1024,
        ),
        cost_estimate=cost,
    )(token_emb, mask3, counts, w, b)


def _reference(token_emb, attn_mask, w, b):
    emb = token_emb.astype(jnp.float32)
    m = attn_mask.astype(jnp.float32)[:, :, None]
    pooled = (emb * m).sum(axis=1) / jnp.maximum(m.sum(axis=1), 1e-9)
    logits = jnp.dot(pooled, w, precision=jax.lax.Precision.HIGHEST) + b
    return jnp.tanh(logits)


if __name__ == "__main__":
    key = jax.random.PRNGKey(0)
    k_emb, k_w, k_b, k_emb2, k_len2 = jax.random.split(key, 5)

    # Deterministic init of the Dense(768, 512) parameters (stored as [H_IN, H_OUT] for x @ W).
    w = jax.random.normal(k_w, (H_IN, H_OUT), dtype=jnp.float32) * (1.0 / jnp.sqrt(H_IN))
    b = jax.random.normal(k_b, (1, H_OUT), dtype=jnp.float32) * 0.01

    # Small test: B=2, S=8 (hidden dims fixed by the module: 768 -> 512). Embeddings in the
    # backbone's native bf16, streamed without up-casting.
    B, S = 2, 8
    token_emb = jax.random.normal(k_emb, (B, S, H_IN), dtype=jnp.float32).astype(jnp.bfloat16)
    attn_mask = jnp.ones((B, S), dtype=jnp.float32).at[1, 5:].set(0.0)  # pad tail of example 1

    out = jax.block_until_ready(language_embeddings_head(token_emb, attn_mask, w, b))
    ref = _reference(token_emb, attn_mask, w, b)
    assert out.shape == (B, H_OUT)
    assert jnp.allclose(out, ref, atol=2e-3, rtol=2e-3)

    # Larger test: ragged S tail (520 % 256 != 0), partial last B tile (10 % 8 != 0), variable
    # sequence lengths. Run both the default (single S block) and tiled (ts=256) configurations.
    B2, S2 = 10, 520
    token_emb2 = jax.random.normal(k_emb2, (B2, S2, H_IN), dtype=jnp.float32).astype(jnp.bfloat16)
    lengths = jax.random.randint(k_len2, (B2,), 1, S2 + 1)
    attn_mask2 = (jnp.arange(S2)[None, :] < lengths[:, None]).astype(jnp.float32)

    ref2 = _reference(token_emb2, attn_mask2, w, b)
    out2a = jax.block_until_ready(language_embeddings_head(token_emb2, attn_mask2, w, b))
    out2b = jax.block_until_ready(language_embeddings_head(token_emb2, attn_mask2, w, b, ts=256))
    assert out2a.shape == (B2, H_OUT) and out2b.shape == (B2, H_OUT)
    assert jnp.allclose(out2a, ref2, atol=2e-3, rtol=2e-3)
    assert jnp.allclose(out2b, ref2, atol=2e-3, rtol=2e-3)

    print("KERNEL_OK")
</pallas_src>

<mosaic_0001>
module attributes {stable_mosaic.version = 11 : i64} {
  func.func @_head_kernel(%arg0: i32, %arg1: i32, %arg2: memref<2x8x768xbf16, #tpu.memory_space<vmem>>, %arg3: memref<2x8x1xbf16, #tpu.memory_space<vmem>>, %arg4: memref<2x1xf32, #tpu.memory_space<vmem>>, %arg5: memref<768x512xf32, #tpu.memory_space<vmem>>, %arg6: memref<1x512xf32, #tpu.memory_space<vmem>>, %arg7: memref<2x512xf32, #tpu.memory_space<vmem>>, %arg8: memref<2x768xf32, #tpu.memory_space<vmem>>) attributes {dimension_semantics = [#tpu.dimension_semantics<parallel>, #tpu.dimension_semantics<arbitrary>], iteration_bounds = array<i64: 1, 1>, scalar_prefetch = 0 : i64, scratch_operands = 1 : i64, tpu.core_type = #tpu.core_type<tc>, window_params = [{transform_indices = @transform_0, window_bounds = array<i64: 2, 8, 768>}, {transform_indices = @transform_1, window_bounds = array<i64: 2, 8, 1>}, {transform_indices = @transform_2, window_bounds = array<i64: 2, 1>}, {pipeline_mode = #tpu.pipeline_mode<synchronous>, transform_indices = @transform_3, window_bounds = array<i64: 768, 512>}, {pipeline_mode = #tpu.pipeline_mode<synchronous>, transform_indices = @transform_4, window_bounds = array<i64: 1, 512>}, {transform_indices = @transform_5, window_bounds = array<i64: 2, 512>}]} {
    %c0_i32 = arith.constant 0 : i32
    %0 = arith.cmpi eq, %arg1, %c0_i32 : i32
    %1 = arith.extui %0 : i1 to i32
    %c0_i32_0 = arith.constant 0 : i32
    %2 = arith.cmpi ne, %1, %c0_i32_0 : i32
    scf.if %2 {
      %cst_14 = arith.constant 0.000000e+00 : f32
      %19 = vector.broadcast %cst_14 : f32 to vector<2x768xf32>
      %c0_15 = arith.constant 0 : index
      %c0_16 = arith.constant 0 : index
      %20 = vector.load %arg8[%c0_15, %c0_16] : memref<2x768xf32, #tpu.memory_space<vmem>>, vector<2x768xf32>
      tpu.vector_store %arg8[%c0_15, %c0_16], %19 {strides = array<i32>} : memref<2x768xf32, #tpu.memory_space<vmem>>, vector<2x768xf32>,
    } else {
    }
    %c0 = arith.constant 0 : index
    %c0_1 = arith.constant 0 : index
    %c0_2 = arith.constant 0 : index
    %3 = vector.load %arg2[%c0, %c0_1, %c0_2] : memref<2x8x768xbf16, #tpu.memory_space<vmem>>, vector<2x8x768xbf16>
    %c0_3 = arith.constant 0 : index
    %c0_4 = arith.constant 0 : index
    %c0_5 = arith.constant 0 : index
    %4 = vector.load %arg3[%c0_3, %c0_4, %c0_5] : memref<2x8x1xbf16, #tpu.memory_space<vmem>>, vector<2x8x1xbf16>
    %cst = arith.constant 0.000000e+00 : bf16
    %5 = vector.broadcast %cst : bf16 to vector<2x8x1xbf16>
    %6 = arith.cmpf ogt, %4, %5 : vector<2x8x1xbf16>
    %cst_6 = arith.constant 0.000000e+00 : bf16
    %7 = vector.shape_cast %6 : vector<2x8x1xi1> to vector<2x8x1xi1>
    %8 = vector.broadcast %7 : vector<2x8x1xi1> to vector<2x8x768xi1>
    %9 = vector.broadcast %cst_6 : bf16 to vector<2x8x768xbf16>
    %10 = arith.select %8, %3, %9 : vector<2x8x768xi1>, vector<2x8x768xbf16>
    %11 = arith.extf %10 : vector<2x8x768xbf16> to vector<2x8x768xf32>
    %c0_7 = arith.constant 0 : index
    %c0_8 = arith.constant 0 : index
    %12 = vector.load %arg8[%c0_7, %c0_8] : memref<2x768xf32, #tpu.memory_space<vmem>>, vector<2x768xf32>
    %cst_9 = arith.constant dense<0.000000e+00> : vector<2x768xf32>
    %13 = vector.multi_reduction <add>, %11, %cst_9 [1] : vector<2x8x768xf32> to vector<2x768xf32>
    %14 = arith.addf %12, %13 : vector<2x768xf32>
    %c0_10 = arith.constant 0 : index
    %c0_11 = arith.constant 0 : index
    %15 = vector.load %arg8[%c0_10, %c0_11] : memref<2x768xf32, #tpu.memory_space<vmem>>, vector<2x768xf32>
    tpu.vector_store %arg8[%c0_10, %c0_11], %14 {strides = array<i32>} : memref<2x768xf32, #tpu.memory_space<vmem>>, vector<2x768xf32>,
    %c0_i32_12 = arith.constant 0 : i32
    %16 = arith.cmpi eq, %arg1, %c0_i32_12 : i32
    %17 = arith.extui %16 : i1 to i32
    %c0_i32_13 = arith.constant 0 : i32
    %18 = arith.cmpi ne, %17, %c0_i32_13 : i32
    scf.if %18 {
      %c0_14 = arith.constant 0 : index
      %c0_15 = arith.constant 0 : index
      %19 = vector.load %arg4[%c0_14, %c0_15] : memref<2x1xf32, #tpu.memory_space<vmem>>, vector<2x1xf32>
      %cst_16 = arith.constant 9.99999971E-10 : f32
      %20 = vector.broadcast %cst_16 : f32 to vector<2x1xf32>
      %21 = arith.maximumf %19, %20 : vector<2x1xf32>
      %c0_17 = arith.constant 0 : index
      %c0_18 = arith.constant 0 : index
      %22 = vector.load %arg8[%c0_17, %c0_18] : memref<2x768xf32, #tpu.memory_space<vmem>>, vector<2x768xf32>
      %23 = vector.broadcast %21 : vector<2x1xf32> to vector<2x768xf32>
      %24 = arith.divf %22, %23 : vector<2x768xf32>
      %c0_19 = arith.constant 0 : index
      %c0_20 = arith.constant 0 : index
      %25 = vector.load %arg5[%c0_19, %c0_20] : memref<768x512xf32, #tpu.memory_space<vmem>>, vector<768x512xf32>
      %cst_21 = arith.constant dense<0.000000e+00> : vector<2x512xf32>
      %26 = tpu.matmul %24, %25, %cst_21 {dimension_numbers = #tpu.dot_dimension_numbers<[1], [0], [0], [1], [0, 0, 1, 1], [], []>} : vector<2x768xf32>, vector<768x512xf32>, vector<2x512xf32> -> vector<2x512xf32>
      %c0_22 = arith.constant 0 : index
      %c0_23 = arith.constant 0 : index
      %27 = vector.load %arg6[%c0_22, %c0_23] : memref<1x512xf32, #tpu.memory_space<vmem>>, vector<1x512xf32>
      %28 = vector.broadcast %27 : vector<1x512xf32> to vector<2x512xf32>
      %29 = arith.addf %26, %28 : vector<2x512xf32>
      %30 = math.tanh %29 : vector<2x512xf32>
      %c0_24 = arith.constant 0 : index
      %c0_25 = arith.constant 0 : index
      %31 = vector.load %arg7[%c0_24, %c0_25] : memref<2x512xf32, #tpu.memory_space<vmem>>, vector<2x512xf32>
      tpu.vector_store %arg7[%c0_24, %c0_25], %30 {strides = array<i32>} : memref<2x512xf32, #tpu.memory_space<vmem>>, vector<2x512xf32>,
    } else {
    }
    return
  }
  func.func @transform_0(%arg0: i32, %arg1: i32) -> (i32, i32, i32) {
    %c0_i32 = arith.constant 0 : i32
    %c0_i32_0 = arith.constant 0 : i32
    return %arg0, %arg1, %c0_i32 : i32, i32, i32
  }
  func.func @transform_1(%arg0: i32, %arg1: i32) -> (i32, i32, i32) {
    %c0_i32 = arith.constant 0 : i32
    %c0_i32_0 = arith.constant 0 : i32
    return %arg0, %arg1, %c0_i32 : i32, i32, i32
  }
  func.func @transform_2(%arg0: i32, %arg1: i32) -> (i32, i32) {
    %c0_i32 = arith.constant 0 : i32
    %c0_i32_0 = arith.constant 0 : i32
    return %arg0, %c0_i32 : i32, i32
  }
  func.func @transform_3(%arg0: i32, %arg1: i32) -> (i32, i32) {
    %c0_i32 = arith.constant 0 : i32
    %c0_i32_0 = arith.constant 0 : i32
    %c0_i32_1 = arith.constant 0 : i32
    return %c0_i32, %c0_i32_0 : i32, i32
  }
  func.func @transform_4(%arg0: i32, %arg1: i32) -> (i32, i32) {
    %c0_i32 = arith.constant 0 : i32
    %c0_i32_0 = arith.constant 0 : i32
    %c0_i32_1 = arith.constant 0 : i32
    return %c0_i32, %c0_i32_0 : i32, i32
  }
  func.func @transform_5(%arg0: i32, %arg1: i32) -> (i32, i32) {
    %c0_i32 = arith.constant 0 : i32
    %c0_i32_0 = arith.constant 0 : i32
    return %arg0, %c0_i32 : i32, i32
  }
}

</mosaic_0001>

<llo_original>
// kernel: tpu_custom_call.1
$region0: #{tpu_custom_call.1}
  #allocation0 [shape = 'u32[]', space=smem, size = 0x4, offset = 0x4, fixed_abs, tag = 'smem constant byte address 0x4 - core index']
  #allocation1 [shape = 'u32[72,128]{1,0:T(1,128)}', space=vmem, size = 0x9000, scoped, tag = 'internal scratch']
  #allocation2 [shape = 'f32[2,768]{1,0:T(2,128)}', space=vmem, size = 0x1800, scoped, tag = 'scratch operand']
  %s0 = inlined_call_operand.hbm [shape: bf16[2,8,768], index: 0, kind: input, shape index: {}]
  %s1 = inlined_call_operand.vmem [shape: bf16[2,8,1], index: 1, kind: input, shape index: {}]
  %s2 = inlined_call_operand.vmem [shape: f32[2,1], index: 2, kind: input, shape index: {}]
  %s3 = inlined_call_operand.hbm [shape: f32[768,512], index: 3, kind: input, shape index: {}]
  %s4 = inlined_call_operand.hbm [shape: f32[1,512], index: 4, kind: input, shape index: {}]
  %s5 = inlined_call_operand.hbm [shape: f32[2,512], index: 5, kind: output, shape index: {}]
  %s6 = sld [smem:[#allocation0]]
  $region50: #{tpu_custom_call.1} parent=0
    _
  %s8 = ssub.s32 1, %s6
  %s9 = scalar_select 0, %s8, %s6
  $region1: #{tpu_custom_call.1} parent=0
    #allocation3 [shape = 'u8[24576]{0}', space=vmem, size = 0x6000, scoped, tag = 'input window, operand 0, single buffered']
    #allocation4 [shape = 's32[1]{0}', space=sflag, size = 0x4, scoped, tag = 'scoped memory for tpu_custom_call.1']
    #allocation5 [shape = 's32[1]{0}', space=sflag, size = 0x4, scoped, tag = 'scoped memory for tpu_custom_call.1']
    #allocation6 [shape = 'u8[1572864]{0}', space=vmem, size = 0x180000, scoped, tag = 'input window, operand 3, single buffered']
    #allocation7 [shape = 's32[1]{0}', space=sflag, size = 0x4, scoped, tag = 'scoped memory for tpu_custom_call.1']
    #allocation8 [shape = 'u8[2048]{0}', space=vmem, size = 0x800, scoped, tag = 'input window, operand 4, single buffered']
    #allocation9 [shape = 'u8[4096]{0}', space=vmem, size = 0x1000, scoped, tag = 'output window, operand 0, single buffered']
    %10 = vsyncpa [#allocation4], 0
    %11 = vsyncpa [#allocation7], 0
    %12 = vsyncpa [#allocation5], 0
    // Predicated region
    $region2: #{tpu_custom_call.1} parent=1 // pred_check
      _
    $region3: #{tpu_custom_call.1} parent=1 // pred_check_branch
      %14 = sbr.rel (0) target = $region5
    $region4: #{tpu_custom_call.1} parent=1 // pred_region
      %16 = vsyncadd [#allocation4], 0
      %s17 = sshll.u32 %s0, 4
      %s18 = int_to_ptr.hbm [resolvable:$true] %s17
      %s19 = sshll.u32 [#allocation3], 4
      %s20 = int_to_ptr.vmem [resolvable:$true] %s19
      %25 = dma.hbm_to_vmem [thread:$0]  %s18, 768, %s20, [#allocation4], 384, 384, 24
    $region5: #{tpu_custom_call.1} parent=1 // pred_fallthru
      _
    // Predicated region
    $region6: #{tpu_custom_call.1} parent=1 // pred_check
      _
    $region7: #{tpu_custom_call.1} parent=1 // pred_check_branch
      %27 = sbr.rel (0) target = $region9
    $region8: #{tpu_custom_call.1} parent=1 // pred_region
      _
    $region9: #{tpu_custom_call.1} parent=1 // pred_fallthru
      _
    // Predicated region
    $region10: #{tpu_custom_call.1} parent=1 // pred_check
      _
    $region11: #{tpu_custom_call.1} parent=1 // pred_check_branch
      %29 = sbr.rel (0) target = $region13
    $region12: #{tpu_custom_call.1} parent=1 // pred_region
      _
    $region13: #{tpu_custom_call.1} parent=1 // pred_fallthru
      _
    // Predicated region
    $region14: #{tpu_custom_call.1} parent=1 // pred_check
      _
    $region15: #{tpu_custom_call.1} parent=1 // pred_check_branch
      %31 = sbr.rel (0) target = $region17
    $region16: #{tpu_custom_call.1} parent=1 // pred_region
      %33 = vsyncadd [#allocation7], 0
      %s34 = sshll.u32 %s3, 4
      %s35 = int_to_ptr.hbm [resolvable:$true] %s34
      %s36 = sshll.u32 [#allocation6], 4
      %s37 = int_to_ptr.vmem [resolvable:$true] %s36
      %42 = dma.hbm_to_vmem [thread:$0]  %s35, 49152, %s37, [#allocation7], 512, 512, 32
    $region17: #{tpu_custom_call.1} parent=1 // pred_fallthru
      _
    // Predicated region
    $region18: #{tpu_custom_call.1} parent=1 // pred_check
      _
    $region19: #{tpu_custom_call.1} parent=1 // pred_check_branch
      %44 = sbr.rel (0) target = $region21
    $region20: #{tpu_custom_call.1} parent=1 // pred_region
      %46 = vsyncadd [#allocation7], 0
      %s48 = sshll.u32 %s4, 4
      %s49 = int_to_ptr.hbm [resolvable:$true] %s48
      %s50 = sshll.u32 [#allocation8], 4
      %s51 = int_to_ptr.vmem [resolvable:$true] %s50
      %53 = dma.hbm_to_vmem [thread:$0]  %s49, 64, %s51, [#allocation7]
    $region21: #{tpu_custom_call.1} parent=1 // pred_fallthru
      _
    // Predicated region
    $region22: #{tpu_custom_call.1} parent=1 // pred_check
      _
    $region23: #{tpu_custom_call.1} parent=1 // pred_check_branch
      %55 = sbr.rel (0) target = $region25
    $region24: #{tpu_custom_call.1} parent=1 // pred_region
      %57 = dma.done [#allocation4], 768
    $region25: #{tpu_custom_call.1} parent=1 // pred_fallthru
      _
    // Predicated region
    $region26: #{tpu_custom_call.1} parent=1 // pred_check
      _
    $region27: #{tpu_custom_call.1} parent=1 // pred_check_branch
      %59 = sbr.rel (0) target = $region29
    $region28: #{tpu_custom_call.1} parent=1 // pred_region
      %61 = dma.done [#allocation7], 49152
    $region29: #{tpu_custom_call.1} parent=1 // pred_fallthru
      _
    // Predicated region
    $region30: #{tpu_custom_call.1} parent=1 // pred_check
      _
    $region31: #{tpu_custom_call.1} parent=1 // pred_check_branch
      %63 = sbr.rel (0) target = $region33
    $region32: #{tpu_custom_call.1} parent=1 // pred_region
      %65 = dma.done [#allocation7], 64
    $region33: #{tpu_custom_call.1} parent=1 // pred_fallthru
      _
    %p67 = scmp.eq.s32.totalorder 0, 0
    // Predicated region
    $region34: #{tpu_custom_call.1} parent=1 // pred_check
      %p68 = pneg %p67
    $region35: #{tpu_custom_call.1} parent=1 // pred_check_branch
      %70 = sbr.rel (%p68) target = $region37
    $region36: #{tpu_custom_call.1} parent=1 // pred_region
      %71 = vst [vmem:[#allocation2] sm:$0xff] 0.0
      %72 = vst [vmem:[#allocation2 + $0x8] sm:$0xf] 0.0
    $region37: #{tpu_custom_call.1} parent=1 // pred_fallthru
      _
    %v73 = vld [vmem:[#allocation3] sm:$0xff]
    %v74 = vld [vmem:[#allocation3 + $0x8] sm:$0xff]
    %v75 = vld [vmem:[#allocation3 + $0x10] sm:$0xff]
    %v76 = vld [vmem:[#allocation3 + $0x18] sm:$0xff]
    %v77 = vld [vmem:[#allocation3 + $0x20] sm:$0xff]
    %v78 = vld [vmem:[#allocation3 + $0x28] sm:$0xff]
    %v79 = vld [vmem:[%s1] sm:$0xf]
    %v80 = vld [vmem:[%s1 + $0x4] sm:$0xf]
    %v81 = vunpack.c.l.bf16 %v79
    %v82 = vunpack.c.l.bf16 %v80
    %vm83 = vcmp.gt.f32.partialorder %v81, 0.0
    %vm84 = vcmp.gt.f32.partialorder %v82, 0.0
    %v85 = vsel %vm83, 1, 0
    %v86 = vsel %vm84, 1, 0
    %87 = vset.pattern.permute.xlu0 0
    %88 = vperm.xlu0 %87, %v85
    %v89 = vpop.permute.xlu0 %88
    %90 = vset.pattern.permute.xlu0 0
    %91 = vperm.xlu0 %90, %v86
    %v92 = vpop.permute.xlu0 %91
    %vm93 = vcmp.eq.s32.totalorder %v89, 1
    %vm94 = vcmp.eq.s32.totalorder %v92, 1
    %vm95 = vmpackc.low %vm93, %vm93
    %vm96 = vmpackc.low %vm94, %vm94
    %v97 = vsel %vm95, %v73, 0
    %v98 = vsel %vm95, %v74, 0
    %v99 = vsel %vm95, %v75, 0
    %v100 = vsel %vm96, %v76, 0
    %v101 = vsel %vm96, %v77, 0
    %v102 = vsel %vm96, %v78, 0
    %v103 = vunpack.c.l.bf16 %v97
    %v104 = vunpack.c.h.bf16 %v97
    %v105 = vunpack.c.l.bf16 %v98
    %v106 = vunpack.c.h.bf16 %v98
    %v107 = vunpack.c.l.bf16 %v99
    %v108 = vunpack.c.h.bf16 %v99
    %v109 = vunpack.c.l.bf16 %v100
    %v110 = vunpack.c.h.bf16 %v100
    %v111 = vunpack.c.l.bf16 %v101
    %v112 = vunpack.c.h.bf16 %v101
    %v113 = vunpack.c.l.bf16 %v102
    %v114 = vunpack.c.h.bf16 %v102
    %v115 = vld [vmem:[#allocation2] sm:$0xff]
    %v116 = vld [vmem:[#allocation2 + $0x8] sm:$0xf]
    %v117 = vrot.slane %v103, 4
    %v118 = vadd.f32 %v103, %v117
    %v119 = vrot.slane %v118, 2
    %v120 = vadd.f32 %v118, %v119
    %v121 = vrot.slane %v120, 1
    %v122 = vadd.f32 %v120, %v121
    %v123 = vrot.slane %v104, 4
    %v124 = vadd.f32 %v104, %v123
    %v125 = vrot.slane %v124, 2
    %v126 = vadd.f32 %v124, %v125
    %v127 = vrot.slane %v126, 1
    %v128 = vadd.f32 %v126, %v127
    %v129 = vrot.slane %v105, 4
    %v130 = vadd.f32 %v105, %v129
    %v131 = vrot.slane %v130, 2
    %v132 = vadd.f32 %v130, %v131
    %v133 = vrot.slane %v132, 1
    %v134 = vadd.f32 %v132, %v133
    %v135 = vrot.slane %v106, 4
    %v136 = vadd.f32 %v106, %v135
    %v137 = vrot.slane %v136, 2
    %v138 = vadd.f32 %v136, %v137
    %v139 = vrot.slane %v138, 1
    %v140 = vadd.f32 %v138, %v139
    %v141 = vrot.slane %v107, 4
    %v142 = vadd.f32 %v107, %v141
    %v143 = vrot.slane %v142, 2
    %v144 = vadd.f32 %v142, %v143
    %v145 = vrot.slane %v144, 1
    %v146 = vadd.f32 %v144, %v145
    %v147 = vrot.slane %v108, 4
    %v148 = vadd.f32 %v108, %v147
    %v149 = vrot.slane %v148, 2
    %v150 = vadd.f32 %v148, %v149
    %v151 = vrot.slane %v150, 1
    %v152 = vadd.f32 %v150, %v151
    %v153 = vrot.slane %v109, 4
    %v154 = vadd.f32 %v109, %v153
    %v155 = vrot.slane %v154, 2
    %v156 = vadd.f32 %v154, %v155
    %v157 = vrot.slane %v156, 1
    %v158 = vadd.f32 %v156, %v157
    %v159 = vrot.slane %v110, 4
    %v160 = vadd.f32 %v110, %v159
    %v161 = vrot.slane %v160, 2
    %v162 = vadd.f32 %v160, %v161
    %v163 = vrot.slane %v162, 1
    %v164 = vadd.f32 %v162, %v163
    %v165 = vrot.slane %v111, 4
    %v166 = vadd.f32 %v111, %v165
    %v167 = vrot.slane %v166, 2
    %v168 = vadd.f32 %v166, %v167
    %v169 = vrot.slane %v168, 1
    %v170 = vadd.f32 %v168, %v169
    %v171 = vrot.slane %v112, 4
    %v172 = vadd.f32 %v112, %v171
    %v173 = vrot.slane %v172, 2
    %v174 = vadd.f32 %v172, %v173
    %v175 = vrot.slane %v174, 1
    %v176 = vadd.f32 %v174, %v175
    %v177 = vrot.slane %v113, 4
    %v178 = vadd.f32 %v113, %v177
    %v179 = vrot.slane %v178, 2
    %v180 = vadd.f32 %v178, %v179
    %v181 = vrot.slane %v180, 1
    %v182 = vadd.f32 %v180, %v181
    %v183 = vrot.slane %v114, 4
    %v184 = vadd.f32 %v114, %v183
    %v185 = vrot.slane %v184, 2
    %v186 = vadd.f32 %v184, %v185
    %v187 = vrot.slane %v186, 1
    %v188 = vadd.f32 %v186, %v187
    %v201 = vrot.slane %v128, 6
    %v202 = vrot.slane %v134, 4
    %v203 = vrot.slane %v140, 2
    %v204 = vrot.slane %v152, 6
    %v205 = vrot.slane %v164, 6
    %v206 = vrot.slane %v170, 4
    %v207 = vrot.slane %v176, 2
    %v208 = vrot.slane %v188, 6
    %vm209 = vcmask 1041408
    %v210 = vsel %vm209, %v122, %v201
    %vm211 = vcmask 1045508
    %v212 = vsel %vm211, %v202, %v203
    %vm213 = vcmask 1043456
    %v214 = vsel %vm213, %v210, %v212
    %v215 = vsel %vm209, %v146, %v204
    %v216 = vsel %vm209, %v158, %v205
    %v217 = vsel %vm211, %v206, %v207
    %v218 = vsel %vm213, %v216, %v217
    %v219 = vsel %vm209, %v182, %v208
    %vm220 = vcmask 1044484
    %v221 = vsel %vm220, %v214, %v214
    %vm222 = vcmask 1046534
    %v223 = vsel %vm222, %v214, %v221
    %v224 = vrot.slane %v218, 7
    %vm225 = vcmask 1041409
    %v226 = vsel %vm225, %v224, %v223
    %vm227 = vcmask 1043459
    %v228 = vsel %vm227, %v224, %v226
    %vm229 = vcmask 1045509
    %v230 = vsel %vm229, %v224, %v228
    %vm231 = vcmask 1047559
    %v232 = vsel %vm231, %v224, %v230
    %v233 = vsel %vm220, %v215, %v215
    %v234 = vsel %vm222, %v215, %v233
    %v235 = vrot.slane %v219, 7
    %v236 = vsel %vm225, %v235, %v234
    %v237 = vsel %vm227, %v235, %v236
    %v238 = vsel %vm229, %v235, %v237
    %v239 = vsel %vm231, %v235, %v238
    %v242 = vadd.f32 %v115, %v232
    %v243 = vadd.f32 %v116, %v239
    %244 = vst [vmem:[#allocation2] sm:$0xff] %v242
    %245 = vst [vmem:[#allocation2 + $0x8] sm:$0xf] %v243
    // Predicated region
    $region38: #{tpu_custom_call.1} parent=1 // pred_check
      %p246 = pneg %p67
    $region39: #{tpu_custom_call.1} parent=1 // pred_check_branch
      %248 = sbr.rel (%p246) target = $region41
    $region40: #{tpu_custom_call.1} parent=1 // pred_region
      %v249 = vld [vmem:[%s2] sm:$0x3]
      %v250 = vmax.f32 %v249, 1e-09
      %v251 = vld [vmem:[#allocation2] sm:$0xff]
      %v252 = vld [vmem:[#allocation2 + $0x8] sm:$0xf]
      %254 = vset.pattern.permute.xlu0 0
      %255 = vperm.xlu0 %254, %v250
      %v256 = vpop.permute.xlu0 %255
      %v258 = vunpack.c.l.s4 269488144
      %v259 = vunpack.c.0.s8 %v258
      %v260 = vperm.slane %v256, %v259
      %v262 = vrcp.pop %v260
      %v263 = vmul.f32 %v260, %v262
      %v264 = vsub.f32 1.0, %v263
      %v265 = vmul.f32 %v262, %v264
      %v266 = vadd.f32 %v262, %v265
      %vm267 = vweird.f32 %v260
      %vm268 = vweird.f32 %v262
      %vm269 = vmor %vm267, %vm268
      %v270 = vsel %vm269, %v262, %v266
      %v271 = vand.u32 2147483647, %v260
      %vm272 = vcmp.eq.f32.partialorder %v271, 8.507059e+37
      %v273 = vand.u32 %v260, 2147483648
      %v274 = vor.u32 1.1754944e-38, %v273
      %v275 = vsel %vm272, %v274, %v270
      %v276 = vmul.f32 %v251, %v275
      %v277 = vmul.f32 %v252, %v275
      %v278 = vld [vmem:[#allocation6] sm:$0xff]
      %v279 = vld [vmem:[#allocation6 + $0x8] sm:$0xff]
      %v280 = vld [vmem:[#allocation6 + $0x10] sm:$0xff]
      %v281 = vld [vmem:[#allocation6 + $0x18] sm:$0xff]
      %v282 = vld [vmem:[#allocation6 + $0x20] sm:$0xff]
      %v283 = vld [vmem:[#allocation6 + $0x28] sm:$0xff]
      %v284 = vld [vmem:[#allocation6 + $0x30] sm:$0xff]
      %v285 = vld [vmem:[#allocation6 + $0x38] sm:$0xff]
      %v286 = vld [vmem:[#allocation6 + $0x40] sm:$0xff]
      %v287 = vld [vmem:[#allocation6 + $0x48] sm:$0xff]
      %v288 = vld [vmem:[#allocation6 + $0x50] sm:$0xff]
      %v289 = vld [vmem:[#allocation6 + $0x58] sm:$0xff]
      %v290 = vld [vmem:[#allocation6 + $0x60] sm:$0xff]
      %v291 = vld [vmem:[#allocation6 + $0x68] sm:$0xff]
      %v292 = vld [vmem:[#allocation6 + $0x70] sm:$0xff]
      %v293 = vld [vmem:[#allocation6 + $0x78] sm:$0xff]
      %v294 = vld [vmem:[#allocation6 + $0x80] sm:$0xff]
      %v295 = vld [vmem:[#allocation6 + $0x88] sm:$0xff]
      %v296 = vld [vmem:[#allocation6 + $0x90] sm:$0xff]
      %v297 = vld [vmem:[#allocation6 + $0x98] sm:$0xff]
      %v298 = vld [vmem:[#allocation6 + $0xa0] sm:$0xff]
      %v299 = vld [vmem:[#allocation6 + $0xa8] sm:$0xff]
      %v300 = vld [vmem:[#allocation6 + $0xb0] sm:$0xff]
      %v301 = vld [vmem:[#allocation6 + $0xb8] sm:$0xff]
      %v302 = vld [vmem:[#allocation6 + $0xc0] sm:$0xff]
      %v303 = vld [vmem:[#allocation6 + $0xc8] sm:$0xff]
      %v304 = vld [vmem:[#allocation6 + $0xd0] sm:$0xff]
      %v305 = vld [vmem:[#allocation6 + $0xd8] sm:$0xff]
      %v306 = vld [vmem:[#allocation6 + $0xe0] sm:$0xff]
      %v307 = vld [vmem:[#allocation6 + $0xe8] sm:$0xff]
      %v308 = vld [vmem:[#allocation6 + $0xf0] sm:$0xff]
      %v309 = vld [vmem:[#allocation6 + $0xf8] sm:$0xff]
      %v310 = vld [vmem:[#allocation6 + $0x100] sm:$0xff]
      %v311 = vld [vmem:[#allocation6 + $0x108] sm:$0xff]
      %v312 = vld [vmem:[#allocation6 + $0x110] sm:$0xff]
      %v313 = vld [vmem:[#allocation6 + $0x118] sm:$0xff]
      %v314 = vld [vmem:[#allocation6 + $0x120] sm:$0xff]
      %v315 = vld [vmem:[#allocation6 + $0x128] sm:$0xff]
      %v316 = vld [vmem:[#allocation6 + $0x130] sm:$0xff]
      %v317 = vld [vmem:[#allocation6 + $0x138] sm:$0xff]
      %v318 = vld [vmem:[#allocation6 + $0x140] sm:$0xff]
      %v319 = vld [vmem:[#allocation6 + $0x148] sm:$0xff]
      %v320 = vld [vmem:[#allocation6 + $0x150] sm:$0xff]
      %v321 = vld [vmem:[#allocation6 + $0x158] sm:$0xff]
      %v322 = vld [vmem:[#allocation6 + $0x160] sm:$0xff]
      %v323 = vld [vmem:[#allocation6 + $0x168] sm:$0xff]
      %v324 = vld [vmem:[#allocation6 + $0x170] sm:$0xff]
      %v325 = vld [vmem:[#allocation6 + $0x178] sm:$0xff]
      %v326 = vld [vmem:[#allocation6 + $0x180] sm:$0xff]
      %v327 = vld [vmem:[#allocation6 + $0x188] sm:$0xff]
      %v328 = vld [vmem:[#allocation6 + $0x190] sm:$0xff]
      %v329 = vld [vmem:[#allocation6 + $0x198] sm:$0xff]
      %v330 = vld [vmem:[#allocation6 + $0x1a0] sm:$0xff]
      %v331 = vld [vmem:[#allocation6 + $0x1a8] sm:$0xff]
      %v332 = vld [vmem:[#allocation6 + $0x1b0] sm:$0xff]
      %v333 = vld [vmem:[#allocation6 + $0x1b8] sm:$0xff]
      %v334 = vld [vmem:[#allocation6 + $0x1c0] sm:$0xff]
      %v335 = vld [vmem:[#allocation6 + $0x1c8] sm:$0xff]
      %v336 = vld [vmem:[#allocation6 + $0x1d0] sm:$0xff]
      %v337 = vld [vmem:[#allocation6 + $0x1d8] sm:$0xff]
      %v338 = vld [vmem:[#allocation6 + $0x1e0] sm:$0xff]
      %v339 = vld [vmem:[#allocation6 + $0x1e8] sm:$0xff]
      %v340 = vld [vmem:[#allocation6 + $0x1f0] sm:$0xff]
      %v341 = vld [vmem:[#allocation6 + $0x1f8] sm:$0xff]
      %v342 = vld [vmem:[#allocation6 + $0x200] sm:$0xff]
      %v343 = vld [vmem:[#allocation6 + $0x208] sm:$0xff]
      %v344 = vld [vmem:[#allocation6 + $0x210] sm:$0xff]
      %v345 = vld [vmem:[#allocation6 + $0x218] sm:$0xff]
      %v346 = vld [vmem:[#allocation6 + $0x220] sm:$0xff]
      %v347 = vld [vmem:[#allocation6 + $0x228] sm:$0xff]
      %v348 = vld [vmem:[#allocation6 + $0x230] sm:$0xff]
      %v349 = vld [vmem:[#allocation6 + $0x238] sm:$0xff]
      %v350 = vld [vmem:[#allocation6 + $0x240] sm:$0xff]
      %v351 = vld [vmem:[#allocation6 + $0x248] sm:$0xff]
      %v352 = vld [vmem:[#allocation6 + $0x250] sm:$0xff]
      %v353 = vld [vmem:[#allocation6 + $0x258] sm:$0xff]
      %v354 = vld [vmem:[#allocation6 + $0x260] sm:$0xff]
      %v355 = vld [vmem:[#allocation6 + $0x268] sm:$0xff]
      %v356 = vld [vmem:[#allocation6 + $0x270] sm:$0xff]
      %v357 = vld [vmem:[#allocation6 + $0x278] sm:$0xff]
      %v358 = vld [vmem:[#allocation6 + $0x280] sm:$0xff]
      %v359 = vld [vmem:[#allocation6 + $0x288] sm:$0xff]
      %v360 = vld [vmem:[#allocation6 + $0x290] sm:$0xff]
      %v361 = vld [vmem:[#allocation6 + $0x298] sm:$0xff]
      %v362 = vld [vmem:[#allocation6 + $0x2a0] sm:$0xff]
      %v363 = vld [vmem:[#allocation6 + $0x2a8] sm:$0xff]
      %v364 = vld [vmem:[#allocation6 + $0x2b0] sm:$0xff]
      %v365 = vld [vmem:[#allocation6 + $0x2b8] sm:$0xff]
      %v366 = vld [vmem:[#allocation6 + $0x2c0] sm:$0xff]
      %v367 = vld [vmem:[#allocation6 + $0x2c8] sm:$0xff]
      %v368 = vld [vmem:[#allocation6 + $0x2d0] sm:$0xff]
      %v369 = vld [vmem:[#allocation6 + $0x2d8] sm:$0xff]
      %v370 = vld [vmem:[#allocation6 + $0x2e0] sm:$0xff]
      %v371 = vld [vmem:[#allocation6 + $0x2e8] sm:$0xff]
      %v372 = vld [vmem:[#allocation6 + $0x2f0] sm:$0xff]
      %v373 = vld [vmem:[#allocation6 + $0x2f8] sm:$0xff]
      %v374 = vld [vmem:[#allocation6 + $0x300] sm:$0xff]
      %v375 = vld [vmem:[#allocation6 + $0x308] sm:$0xff]
      %v376 = vld [vmem:[#allocation6 + $0x310] sm:$0xff]
      %v377 = vld [vmem:[#allocation6 + $0x318] sm:$0xff]
      %v378 = vld [vmem:[#allocation6 + $0x320] sm:$0xff]
      %v379 = vld [vmem:[#allocation6 + $0x328] sm:$0xff]
      %v380 = vld [vmem:[#allocation6 + $0x330] sm:$0xff]
      %v381 = vld [vmem:[#allocation6 + $0x338] sm:$0xff]
      %v382 = vld [vmem:[#allocation6 + $0x340] sm:$0xff]
      %v383 = vld [vmem:[#allocation6 + $0x348] sm:$0xff]
      %v384 = vld [vmem:[#allocation6 + $0x350] sm:$0xff]
      %v385 = vld [vmem:[#allocation6 + $0x358] sm:$0xff]
      %v386 = vld [vmem:[#allocation6 + $0x360] sm:$0xff]
      %v387 = vld [vmem:[#allocation6 + $0x368] sm:$0xff]
      %v388 = vld [vmem:[#allocation6 + $0x370] sm:$0xff]
      %v389 = vld [vmem:[#allocation6 + $0x378] sm:$0xff]
      %v390 = vld [vmem:[#allocation6 + $0x380] sm:$0xff]
      %v391 = vld [vmem:[#allocation6 + $0x388] sm:$0xff]
      %v392 = vld [vmem:[#allocation6 + $0x390] sm:$0xff]
      %v393 = vld [vmem:[#allocation6 + $0x398] sm:$0xff]
      %v394 = vld [vmem:[#allocation6 + $0x3a0] sm:$0xff]
      %v395 = vld [vmem:[#allocation6 + $0x3a8] sm:$0xff]
      %v396 = vld [vmem:[#allocation6 + $0x3b0] sm:$0xff]
      %v397 = vld [vmem:[#allocation6 + $0x3b8] sm:$0xff]
      %v398 = vld [vmem:[#allocation6 + $0x3c0] sm:$0xff]
      %v399 = vld [vmem:[#allocation6 + $0x3c8] sm:$0xff]
      %v400 = vld [vmem:[#allocation6 + $0x3d0] sm:$0xff]
      %v401 = vld [vmem:[#allocation6 + $0x3d8] sm:$0xff]
      %v402 = vld [vmem:[#allocation6 + $0x3e0] sm:$0xff]
      %v403 = vld [vmem:[#allocation6 + $0x3e8] sm:$0xff]
      %v404 = vld [vmem:[#allocation6 + $0x3f0] sm:$0xff]
      %v405 = vld [vmem:[#allocation6 + $0x3f8] sm:$0xff]
      %v406 = vld [vmem:[#allocation6 + $0x400] sm:$0xff]
      %v407 = vld [vmem:[#allocation6 + $0x408] sm:$0xff]
      %v408 = vld [vmem:[#allocation6 + $0x410] sm:$0xff]
      %v409 = vld [vmem:[#allocation6 + $0x418] sm:$0xff]
      %v410 = vld [vmem:[#allocation6 + $0x420] sm:$0xff]
      %v411 = vld [vmem:[#allocation6 + $0x428] sm:$0xff]
      %v412 = vld [vmem:[#allocation6 + $0x430] sm:$0xff]
      %v413 = vld [vmem:[#allocation6 + $0x438] sm:$0xff]
      %v414 = vld [vmem:[#allocation6 + $0x440] sm:$0xff]
      %v415 = vld [vmem:[#allocation6 + $0x448] sm:$0xff]
      %v416 = vld [vmem:[#allocation6 + $0x450] sm:$0xff]
      %v417 = vld [vmem:[#allocation6 + $0x458] sm:$0xff]
      %v418 = vld [vmem:[#allocation6 + $0x460] sm:$0xff]
      %v419 = vld [vmem:[#allocation6 + $0x468] sm:$0xff]
      %v420 = vld [vmem:[#allocation6 + $0x470] sm:$0xff]
      %v421 = vld [vmem:[#allocation6 + $0x478] sm:$0xff]
      %v422 = vld [vmem:[#allocation6 + $0x480] sm:$0xff]
      %v423 = vld [vmem:[#allocation6 + $0x488] sm:$0xff]
      %v424 = vld [vmem:[#allocation6 + $0x490] sm:$0xff]
      %v425 = vld [vmem:[#allocation6 + $0x498] sm:$0xff]
      %v426 = vld [vmem:[#allocation6 + $0x4a0] sm:$0xff]
      %v427 = vld [vmem:[#allocation6 + $0x4a8] sm:$0xff]
      %v428 = vld [vmem:[#allocation6 + $0x4b0] sm:$0xff]
      %v429 = vld [vmem:[#allocation6 + $0x4b8] sm:$0xff]
      %v430 = vld [vmem:[#allocation6 + $0x4c0] sm:$0xff]
      %v431 = vld [vmem:[#allocation6 + $0x4c8] sm:$0xff]
      %v432 = vld [vmem:[#allocation6 + $0x4d0] sm:$0xff]
      %v433 = vld [vmem:[#allocation6 + $0x4d8] sm:$0xff]
      %v434 = vld [vmem:[#allocation6 + $0x4e0] sm:$0xff]
      %v435 = vld [vmem:[#allocation6 + $0x4e8] sm:$0xff]
      %v436 = vld [vmem:[#allocation6 + $0x4f0] sm:$0xff]
      %v437 = vld [vmem:[#allocation6 + $0x4f8] sm:$0xff]
      %v438 = vld [vmem:[#allocation6 + $0x500] sm:$0xff]
      %v439 = vld [vmem:[#allocation6 + $0x508] sm:$0xff]
      %v440 = vld [vmem:[#allocation6 + $0x510] sm:$0xff]
      %v441 = vld [vmem:[#allocation6 + $0x518] sm:$0xff]
      %v442 = vld [vmem:[#allocation6 + $0x520] sm:$0xff]
      %v443 = vld [vmem:[#allocation6 + $0x528] sm:$0xff]
      %v444 = vld [vmem:[#allocation6 + $0x530] sm:$0xff]
      %v445 = vld [vmem:[#allocation6 + $0x538] sm:$0xff]
      %v446 = vld [vmem:[#allocation6 + $0x540] sm:$0xff]
      %v447 = vld [vmem:[#allocation6 + $0x548] sm:$0xff]
      %v448 = vld [vmem:[#allocation6 + $0x550] sm:$0xff]
      %v449 = vld [vmem:[#allocation6 + $0x558] sm:$0xff]
      %v450 = vld [vmem:[#allocation6 + $0x560] sm:$0xff]
      %v451 = vld [vmem:[#allocation6 + $0x568] sm:$0xff]
      %v452 = vld [vmem:[#allocation6 + $0x570] sm:$0xff]
      %v453 = vld [vmem:[#allocation6 + $0x578] sm:$0xff]
      %v454 = vld [vmem:[#allocation6 + $0x580] sm:$0xff]
      %v455 = vld [vmem:[#allocation6 + $0x588] sm:$0xff]
      %v456 = vld [vmem:[#allocation6 + $0x590] sm:$0xff]
      %v457 = vld [vmem:[#allocation6 + $0x598] sm:$0xff]
      %v458 = vld [vmem:[#allocation6 + $0x5a0] sm:$0xff]
      %v459 = vld [vmem:[#allocation6 + $0x5a8] sm:$0xff]
      %v460 = vld [vmem:[#allocation6 + $0x5b0] sm:$0xff]
      %v461 = vld [vmem:[#allocation6 + $0x5b8] sm:$0xff]
      %v462 = vld [vmem:[#allocation6 + $0x5c0] sm:$0xff]
      %v463 = vld [vmem:[#allocation6 + $0x5c8] sm:$0xff]
      %v464 = vld [vmem:[#allocation6 + $0x5d0] sm:$0xff]
      %v465 = vld [vmem:[#allocation6 + $0x5d8] sm:$0xff]
      %v466 = vld [vmem:[#allocation6 + $0x5e0] sm:$0xff]
      %v467 = vld [vmem:[#allocation6 + $0x5e8] sm:$0xff]
      %v468 = vld [vmem:[#allocation6 + $0x5f0] sm:$0xff]
      %v469 = vld [vmem:[#allocation6 + $0x5f8] sm:$0xff]
      %v470 = vld [vmem:[#allocation6 + $0x600] sm:$0xff]
      %v471 = vld [vmem:[#allocation6 + $0x608] sm:$0xff]
      %v472 = vld [vmem:[#allocation6 + $0x610] sm:$0xff]
      %v473 = vld [vmem:[#allocation6 + $0x618] sm:$0xff]
      %v474 = vld [vmem:[#allocation6 + $0x620] sm:$0xff]
      %v475 = vld [vmem:[#allocation6 + $0x628] sm:$0xff]
      %v476 = vld [vmem:[#allocation6 + $0x630] sm:$0xff]
      %v477 = vld [vmem:[#allocation6 + $0x638] sm:$0xff]
      %v478 = vld [vmem:[#allocation6 + $0x640] sm:$0xff]
      %v479 = vld [vmem:[#allocation6 + $0x648] sm:$0xff]
      %v480 = vld [vmem:[#allocation6 + $0x650] sm:$0xff]
      %v481 = vld [vmem:[#allocation6 + $0x658] sm:$0xff]
      %v482 = vld [vmem:[#allocation6 + $0x660] sm:$0xff]
      %v483 = vld [vmem:[#allocation6 + $0x668] sm:$0xff]
      %v484 = vld [vmem:[#allocation6 + $0x670] sm:$0xff]
      %v485 = vld [vmem:[#allocation6 + $0x678] sm:$0xff]
      %v486 = vld [vmem:[#allocation6 + $0x680] sm:$0xff]
      %v487 = vld [vmem:[#allocation6 + $0x688] sm:$0xff]
      %v488 = vld [vmem:[#allocation6 + $0x690] sm:$0xff]
      %v489 = vld [vmem:[#allocation6 + $0x698] sm:$0xff]
      %v490 = vld [vmem:[#allocation6 + $0x6a0] sm:$0xff]
      %v491 = vld [vmem:[#allocation6 + $0x6a8] sm:$0xff]
      %v492 = vld [vmem:[#allocation6 + $0x6b0] sm:$0xff]
      %v493 = vld [vmem:[#allocation6 + $0x6b8] sm:$0xff]
      %v494 = vld [vmem:[#allocation6 + $0x6c0] sm:$0xff]
      %v495 = vld [vmem:[#allocation6 + $0x6c8] sm:$0xff]
      %v496 = vld [vmem:[#allocation6 + $0x6d0] sm:$0xff]
      %v497 = vld [vmem:[#allocation6 + $0x6d8] sm:$0xff]
      %v498 = vld [vmem:[#allocation6 + $0x6e0] sm:$0xff]
      %v499 = vld [vmem:[#allocation6 + $0x6e8] sm:$0xff]
      %v500 = vld [vmem:[#allocation6 + $0x6f0] sm:$0xff]
      %v501 = vld [vmem:[#allocation6 + $0x6f8] sm:$0xff]
      %v502 = vld [vmem:[#allocation6 + $0x700] sm:$0xff]
      %v503 = vld [vmem:[#allocation6 + $0x708] sm:$0xff]
      %v504 = vld [vmem:[#allocation6 + $0x710] sm:$0xff]
      %v505 = vld [vmem:[#allocation6 + $0x718] sm:$0xff]
      %v506 = vld [vmem:[#allocation6 + $0x720] sm:$0xff]
      %v507 = vld [vmem:[#allocation6 + $0x728] sm:$0xff]
      %v508 = vld [vmem:[#allocation6 + $0x730] sm:$0xff]
      %v509 = vld [vmem:[#allocation6 + $0x738] sm:$0xff]
      %v510 = vld [vmem:[#allocation6 + $0x740] sm:$0xff]
      %v511 = vld [vmem:[#allocation6 + $0x748] sm:$0xff]
      %v512 = vld [vmem:[#allocation6 + $0x750] sm:$0xff]
      %v513 = vld [vmem:[#allocation6 + $0x758] sm:$0xff]
      %v514 = vld [vmem:[#allocation6 + $0x760] sm:$0xff]
      %v515 = vld [vmem:[#allocation6 + $0x768] sm:$0xff]
      %v516 = vld [vmem:[#allocation6 + $0x770] sm:$0xff]
      %v517 = vld [vmem:[#allocation6 + $0x778] sm:$0xff]
      %v518 = vld [vmem:[#allocation6 + $0x780] sm:$0xff]
      %v519 = vld [vmem:[#allocation6 + $0x788] sm:$0xff]
      %v520 = vld [vmem:[#allocation6 + $0x790] sm:$0xff]
      %v521 = vld [vmem:[#allocation6 + $0x798] sm:$0xff]
      %v522 = vld [vmem:[#allocation6 + $0x7a0] sm:$0xff]
      %v523 = vld [vmem:[#allocation6 + $0x7a8] sm:$0xff]
      %v524 = vld [vmem:[#allocation6 + $0x7b0] sm:$0xff]
      %v525 = vld [vmem:[#allocation6 + $0x7b8] sm:$0xff]
      %v526 = vld [vmem:[#allocation6 + $0x7c0] sm:$0xff]
      %v527 = vld [vmem:[#allocation6 + $0x7c8] sm:$0xff]
      %v528 = vld [vmem:[#allocation6 + $0x7d0] sm:$0xff]
      %v529 = vld [vmem:[#allocation6 + $0x7d8] sm:$0xff]
      %v530 = vld [vmem:[#allocation6 + $0x7e0] sm:$0xff]
      %v531 = vld [vmem:[#allocation6 + $0x7e8] sm:$0xff]
      %v532 = vld [vmem:[#allocation6 + $0x7f0] sm:$0xff]
      %v533 = vld [vmem:[#allocation6 + $0x7f8] sm:$0xff]
      %v534 = vld [vmem:[#allocation6 + $0x800] sm:$0xff]
      %v535 = vld [vmem:[#allocation6 + $0x808] sm:$0xff]
      %v536 = vld [vmem:[#allocation6 + $0x810] sm:$0xff]
      %v537 = vld [vmem:[#allocation6 + $0x818] sm:$0xff]
      %v538 = vld [vmem:[#allocation6 + $0x820] sm:$0xff]
      %v539 = vld [vmem:[#allocation6 + $0x828] sm:$0xff]
      %v540 = vld [vmem:[#allocation6 + $0x830] sm:$0xff]
      %v541 = vld [vmem:[#allocation6 + $0x838] sm:$0xff]
      %v542 = vld [vmem:[#allocation6 + $0x840] sm:$0xff]
      %v543 = vld [vmem:[#allocation6 + $0x848] sm:$0xff]
      %v544 = vld [vmem:[#allocation6 + $0x850] sm:$0xff]
      %v545 = vld [vmem:[#allocation6 + $0x858] sm:$0xff]
      %v546 = vld [vmem:[#allocation6 + $0x860] sm:$0xff]
      %v547 = vld [vmem:[#allocation6 + $0x868] sm:$0xff]
      %v548 = vld [vmem:[#allocation6 + $0x870] sm:$0xff]
      %v549 = vld [vmem:[#allocation6 + $0x878] sm:$0xff]
      %v550 = vld [vmem:[#allocation6 + $0x880] sm:$0xff]
      %v551 = vld [vmem:[#allocation6 + $0x888] sm:$0xff]
      %v552 = vld [vmem:[#allocation6 + $0x890] sm:$0xff]
      %v553 = vld [vmem:[#allocation6 + $0x898] sm:$0xff]
      %v554 = vld [vmem:[#allocation6 + $0x8a0] sm:$0xff]
      %v555 = vld [vmem:[#allocation6 + $0x8a8] sm:$0xff]
      %v556 = vld [vmem:[#allocation6 + $0x8b0] sm:$0xff]
      %v557 = vld [vmem:[#allocation6 + $0x8b8] sm:$0xff]
      %v558 = vld [vmem:[#allocation6 + $0x8c0] sm:$0xff]
      %v559 = vld [vmem:[#allocation6 + $0x8c8] sm:$0xff]
      %v560 = vld [vmem:[#allocation6 + $0x8d0] sm:$0xff]
      %v561 = vld [vmem:[#allocation6 + $0x8d8] sm:$0xff]
      %v562 = vld [vmem:[#allocation6 + $0x8e0] sm:$0xff]
      %v563 = vld [vmem:[#allocation6 + $0x8e8] sm:$0xff]
      %v564 = vld [vmem:[#allocation6 + $0x8f0] sm:$0xff]
      %v565 = vld [vmem:[#allocation6 + $0x8f8] sm:$0xff]
      %v566 = vld [vmem:[#allocation6 + $0x900] sm:$0xff]
      %v567 = vld [vmem:[#allocation6 + $0x908] sm:$0xff]
      %v568 = vld [vmem:[#allocation6 + $0x910] sm:$0xff]
      %v569 = vld [vmem:[#allocation6 + $0x918] sm:$0xff]
      %v570 = vld [vmem:[#allocation6 + $0x920] sm:$0xff]
      %v571 = vld [vmem:[#allocation6 + $0x928] sm:$0xff]
      %v572 = vld [vmem:[#allocation6 + $0x930] sm:$0xff]
      %v573 = vld [vmem:[#allocation6 + $0x938] sm:$0xff]
      %v574 = vld [vmem:[#allocation6 + $0x940] sm:$0xff]
      %v575 = vld [vmem:[#allocation6 + $0x948] sm:$0xff]
      %v576 = vld [vmem:[#allocation6 + $0x950] sm:$0xff]
      %v577 = vld [vmem:[#allocation6 + $0x958] sm:$0xff]
      %v578 = vld [vmem:[#allocation6 + $0x960] sm:$0xff]
      %v579 = vld [vmem:[#allocation6 + $0x968] sm:$0xff]
      %v580 = vld [vmem:[#allocation6 + $0x970] sm:$0xff]
      %v581 = vld [vmem:[#allocation6 + $0x978] sm:$0xff]
      %v582 = vld [vmem:[#allocation6 + $0x980] sm:$0xff]
      %v583 = vld [vmem:[#allocation6 + $0x988] sm:$0xff]
      %v584 = vld [vmem:[#allocation6 + $0x990] sm:$0xff]
      %v585 = vld [vmem:[#allocation6 + $0x998] sm:$0xff]
      %v586 = vld [vmem:[#allocation6 + $0x9a0] sm:$0xff]
      %v587 = vld [vmem:[#allocation6 + $0x9a8] sm:$0xff]
      %v588 = vld [vmem:[#allocation6 + $0x9b0] sm:$0xff]
      %v589 = vld [vmem:[#allocation6 + $0x9b8] sm:$0xff]
      %v590 = vld [vmem:[#allocation6 + $0x9c0] sm:$0xff]
      %v591 = vld [vmem:[#allocation6 + $0x9c8] sm:$0xff]
      %v592 = vld [vmem:[#allocation6 + $0x9d0] sm:$0xff]
      %v593 = vld [vmem:[#allocation6 + $0x9d8] sm:$0xff]
      %v594 = vld [vmem:[#allocation6 + $0x9e0] sm:$0xff]
      %v595 = vld [vmem:[#allocation6 + $0x9e8] sm:$0xff]
      %v596 = vld [vmem:[#allocation6 + $0x9f0] sm:$0xff]
      %v597 = vld [vmem:[#allocation6 + $0x9f8] sm:$0xff]
      %v598 = vld [vmem:[#allocation6 + $0xa00] sm:$0xff]
      %v599 = vld [vmem:[#allocation6 + $0xa08] sm:$0xff]
      %v600 = vld [vmem:[#allocation6 + $0xa10] sm:$0xff]
      %v601 = vld [vmem:[#allocation6 + $0xa18] sm:$0xff]
      %v602 = vld [vmem:[#allocation6 + $0xa20] sm:$0xff]
      %v603 = vld [vmem:[#allocation6 + $0xa28] sm:$0xff]
      %v604 = vld [vmem:[#allocation6 + $0xa30] sm:$0xff]
      %v605 = vld [vmem:[#allocation6 + $0xa38] sm:$0xff]
      %v606 = vld [vmem:[#allocation6 + $0xa40] sm:$0xff]
      %v607 = vld [vmem:[#allocation6 + $0xa48] sm:$0xff]
      %v608 = vld [vmem:[#allocation6 + $0xa50] sm:$0xff]
      %v609 = vld [vmem:[#allocation6 + $0xa58] sm:$0xff]
      %v610 = vld [vmem:[#allocation6 + $0xa60] sm:$0xff]
      %v611 = vld [vmem:[#allocation6 + $0xa68] sm:$0xff]
      %v612 = vld [vmem:[#allocation6 + $0xa70] sm:$0xff]
      %v613 = vld [vmem:[#allocation6 + $0xa78] sm:$0xff]
      %v614 = vld [vmem:[#allocation6 + $0xa80] sm:$0xff]
      %v615 = vld [vmem:[#allocation6 + $0xa88] sm:$0xff]
      %v616 = vld [vmem:[#allocation6 + $0xa90] sm:$0xff]
      %v617 = vld [vmem:[#allocation6 + $0xa98] sm:$0xff]
      %v618 = vld [vmem:[#allocation6 + $0xaa0] sm:$0xff]
      %v619 = vld [vmem:[#allocation6 + $0xaa8] sm:$0xff]
      %v620 = vld [vmem:[#allocation6 + $0xab0] sm:$0xff]
      %v621 = vld [vmem:[#allocation6 + $0xab8] sm:$0xff]
      %v622 = vld [vmem:[#allocation6 + $0xac0] sm:$0xff]
      %v623 = vld [vmem:[#allocation6 + $0xac8] sm:$0xff]
      %v624 = vld [vmem:[#allocation6 + $0xad0] sm:$0xff]
      %v625 = vld [vmem:[#allocation6 + $0xad8] sm:$0xff]
      %v626 = vld [vmem:[#allocation6 + $0xae0] sm:$0xff]
      %v627 = vld [vmem:[#allocation6 + $0xae8] sm:$0xff]
      %v628 = vld [vmem:[#allocation6 + $0xaf0] sm:$0xff]
      %v629 = vld [vmem:[#allocation6 + $0xaf8] sm:$0xff]
      %v630 = vld [vmem:[#allocation6 + $0xb00] sm:$0xff]
      %v631 = vld [vmem:[#allocation6 + $0xb08] sm:$0xff]
      %v632 = vld [vmem:[#allocation6 + $0xb10] sm:$0xff]
      %v633 = vld [vmem:[#allocation6 + $0xb18] sm:$0xff]
      %v634 = vld [vmem:[#allocation6 + $0xb20] sm:$0xff]
      %v635 = vld [vmem:[#allocation6 + $0xb28] sm:$0xff]
      %v636 = vld [vmem:[#allocation6 + $0xb30] sm:$0xff]
      %v637 = vld [vmem:[#allocation6 + $0xb38] sm:$0xff]
      %v638 = vld [vmem:[#allocation6 + $0xb40] sm:$0xff]
      %v639 = vld [vmem:[#allocation6 + $0xb48] sm:$0xff]
      %v640 = vld [vmem:[#allocation6 + $0xb50] sm:$0xff]
      %v641 = vld [vmem:[#allocation6 + $0xb58] sm:$0xff]
      %v642 = vld [vmem:[#allocation6 + $0xb60] sm:$0xff]
      %v643 = vld [vmem:[#allocation6 + $0xb68] sm:$0xff]
      %v644 = vld [vmem:[#allocation6 + $0xb70] sm:$0xff]
      %v645 = vld [vmem:[#allocation6 + $0xb78] sm:$0xff]
      %v646 = vld [vmem:[#allocation6 + $0xb80] sm:$0xff]
      %v647 = vld [vmem:[#allocation6 + $0xb88] sm:$0xff]
      %v648 = vld [vmem:[#allocation6 + $0xb90] sm:$0xff]
      %v649 = vld [vmem:[#allocation6 + $0xb98] sm:$0xff]
      %v650 = vld [vmem:[#allocation6 + $0xba0] sm:$0xff]
      %v651 = vld [vmem:[#allocation6 + $0xba8] sm:$0xff]
      %v652 = vld [vmem:[#allocation6 + $0xbb0] sm:$0xff]
      %v653 = vld [vmem:[#allocation6 + $0xbb8] sm:$0xff]
      %v654 = vld [vmem:[#allocation6 + $0xbc0] sm:$0xff]
      %v655 = vld [vmem:[#allocation6 + $0xbc8] sm:$0xff]
      %v656 = vld [vmem:[#allocation6 + $0xbd0] sm:$0xff]
      %v657 = vld [vmem:[#allocation6 + $0xbd8] sm:$0xff]
      %v658 = vld [vmem:[#allocation6 + $0xbe0] sm:$0xff]
      %v659 = vld [vmem:[#allocation6 + $0xbe8] sm:$0xff]
      %v660 = vld [vmem:[#allocation6 + $0xbf0] sm:$0xff]
      %v661 = vld [vmem:[#allocation6 + $0xbf8] sm:$0xff]
      %v662 = vld [vmem:[#allocation8] sm:$0xf]
      %v664 = vperm.slane %v662, 0
      %v665 = vperm.slane %v662, 1
      %v666 = vperm.slane %v662, 2
      %v667 = vperm.slane %v662, 3
      %674 = vst [vmem:[#allocation1] ss:$4 sm:$0xff] %v276
      %s675 = scalar_lea.vmem [#allocation1], 32
      %676 = vst [vmem:[%s675] ss:$4 sm:$0xff] %v277
      %v677 = vld.sshfl [vmem:[#allocation1] sm:$0xff pattern:$0x73625140]
      %v678 = vld.sshfl [vmem:[#allocation1 + $0x8] sm:$0xff pattern:$0x73625140]
      %v679 = vld.sshfl [vmem:[#allocation1 + $0x10] sm:$0xff pattern:$0x73625140]
      %v680 = vld.sshfl [vmem:[#allocation1 + $0x18] sm:$0xff pattern:$0x73625140]
      %v681 = vld.sshfl [vmem:[#allocation1 + $0x20] sm:$0xff pattern:$0x73625140]
      %v682 = vld.sshfl [vmem:[#allocation1 + $0x28] sm:$0xff pattern:$0x73625140]
      %689 = vmatpush.msra.mxu0 %v338
      %690 = vmatpush.msra.mxu0 %v334
      %691 = vmatpush.msra.mxu0 %v330
      %692 = vmatpush.msra.mxu0 %v326
      %693 = vmatpush.msra.mxu0 %v322
      %694 = vmatpush.msra.mxu0 %v318
      %695 = vmatpush.msra.mxu0 %v314
      %696 = vmatpush.msra.mxu0 %v310
      %697 = vmatpush.msra.mxu0 %v306
      %698 = vmatpush.msra.mxu0 %v302
      %699 = vmatpush.msra.mxu0 %v298
      %700 = vmatpush.msra.mxu0 %v294
      %701 = vmatpush.msra.mxu0 %v290
      %702 = vmatpush.msra.mxu0 %v286
      %703 = vmatpush.msra.mxu0 %v282
      %704 = vmatpush.msra.mxu0 %v278
      %705 = vmatmul.f32.gmra.mxu0 %v677
      %v706 = vpop.f32.mrf.mxu0
      %v707 = vadd.f32 %v664, %v706
      %708 = vdwg.mxu0
      %709 = vmatpush.msra.mxu0 %v402
      %710 = vmatpush.msra.mxu0 %v398
      %711 = vmatpush.msra.mxu0 %v394
      %712 = vmatpush.msra.mxu0 %v390
      %713 = vmatpush.msra.mxu0 %v386
      %714 = vmatpush.msra.mxu0 %v382
      %715 = vmatpush.msra.mxu0 %v378
      %716 = vmatpush.msra.mxu0 %v374
      %717 = vmatpush.msra.mxu0 %v370
      %718 = vmatpush.msra.mxu0 %v366
      %719 = vmatpush.msra.mxu0 %v362
      %720 = vmatpush.msra.mxu0 %v358
      %721 = vmatpush.msra.mxu0 %v354
      %722 = vmatpush.msra.mxu0 %v350
      %723 = vmatpush.msra.mxu0 %v346
      %724 = vmatpush.msra.mxu0 %v342
      %725 = vmatmul.f32.gmra.mxu0 %v678
      %v726 = vpop.f32.mrf.mxu0
      %v727 = vadd.f32 %v707, %v726
      %728 = vdwg.mxu0
      %729 = vmatpush.msra.mxu0 %v466
      %730 = vmatpush.msra.mxu0 %v462
      %731 = vmatpush.msra.mxu0 %v458
      %732 = vmatpush.msra.mxu0 %v454
      %733 = vmatpush.msra.mxu0 %v450
      %734 = vmatpush.msra.mxu0 %v446
      %735 = vmatpush.msra.mxu0 %v442
      %736 = vmatpush.msra.mxu0 %v438
      %737 = vmatpush.msra.mxu0 %v434
      %738 = vmatpush.msra.mxu0 %v430
      %739 = vmatpush.msra.mxu0 %v426
      %740 = vmatpush.msra.mxu0 %v422
      %741 = vmatpush.msra.mxu0 %v418
      %742 = vmatpush.msra.mxu0 %v414
      %743 = vmatpush.msra.mxu0 %v410
      %744 = vmatpush.msra.mxu0 %v406
      %745 = vmatmul.f32.gmra.mxu0 %v679
      %v746 = vpop.f32.mrf.mxu0
      %v747 = vadd.f32 %v727, %v746
      %748 = vdwg.mxu0
      %749 = vmatpush.msra.mxu0 %v530
      %750 = vmatpush.msra.mxu0 %v526
      %751 = vmatpush.msra.mxu0 %v522
      %752 = vmatpush.msra.mxu0 %v518
      %753 = vmatpush.msra.mxu0 %v514
      %754 = vmatpush.msra.mxu0 %v510
      %755 = vmatpush.msra.mxu0 %v506
      %756 = vmatpush.msra.mxu0 %v502
      %757 = vmatpush.msra.mxu0 %v498
      %758 = vmatpush.msra.mxu0 %v494
      %759 = vmatpush.msra.mxu0 %v490
      %760 = vmatpush.msra.mxu0 %v486
      %761 = vmatpush.msra.mxu0 %v482
      %762 = vmatpush.msra.mxu0 %v478
      %763 = vmatpush.msra.mxu0 %v474
      %764 = vmatpush.msra.mxu0 %v470
      %765 = vmatmul.f32.gmra.mxu0 %v680
      %v766 = vpop.f32.mrf.mxu0
      %v767 = vadd.f32 %v747, %v766
      %768 = vdwg.mxu0
      %769 = vmatpush.msra.mxu0 %v594
      %770 = vmatpush.msra.mxu0 %v590
      %771 = vmatpush.msra.mxu0 %v586
      %772 = vmatpush.msra.mxu0 %v582
      %773 = vmatpush.msra.mxu0 %v578
      %774 = vmatpush.msra.mxu0 %v574
      %775 = vmatpush.msra.mxu0 %v570
      %776 = vmatpush.msra.mxu0 %v566
      %777 = vmatpush.msra.mxu0 %v562
      %778 = vmatpush.msra.mxu0 %v558
      %779 = vmatpush.msra.mxu0 %v554
      %780 = vmatpush.msra.mxu0 %v550
      %781 = vmatpush.msra.mxu0 %v546
      %782 = vmatpush.msra.mxu0 %v542
      %783 = vmatpush.msra.mxu0 %v538
      %784 = vmatpush.msra.mxu0 %v534
      %785 = vmatmul.f32.gmra.mxu0 %v681
      %v786 = vpop.f32.mrf.mxu0
      %v787 = vadd.f32 %v767, %v786
      %788 = vdwg.mxu0
      %789 = vmatpush.msra.mxu0 %v658
      %790 = vmatpush.msra.mxu0 %v654
      %791 = vmatpush.msra.mxu0 %v650
      %792 = vmatpush.msra.mxu0 %v646
      %793 = vmatpush.msra.mxu0 %v642
      %794 = vmatpush.msra.mxu0 %v638
      %795 = vmatpush.msra.mxu0 %v634
      %796 = vmatpush.msra.mxu0 %v630
      %797 = vmatpush.msra.mxu0 %v626
      %798 = vmatpush.msra.mxu0 %v622
      %799 = vmatpush.msra.mxu0 %v618
      %800 = vmatpush.msra.mxu0 %v614
      %801 = vmatpush.msra.mxu0 %v610
      %802 = vmatpush.msra.mxu0 %v606
      %803 = vmatpush.msra.mxu0 %v602
      %804 = vmatpush.msra.mxu0 %v598
      %805 = vmatmul.f32.gmra.mxu0 %v682
      %v806 = vpop.f32.mrf.mxu0
      %v807 = vadd.f32 %v787, %v806
      %808 = vdwg.mxu0
      %809 = vmatpush.msra.mxu0 %v339
      %810 = vmatpush.msra.mxu0 %v335
      %811 = vmatpush.msra.mxu0 %v331
      %812 = vmatpush.msra.mxu0 %v327
      %813 = vmatpush.msra.mxu0 %v323
      %814 = vmatpush.msra.mxu0 %v319
      %815 = vmatpush.msra.mxu0 %v315
      %816 = vmatpush.msra.mxu0 %v311
      %817 = vmatpush.msra.mxu0 %v307
      %818 = vmatpush.msra.mxu0 %v303
      %819 = vmatpush.msra.mxu0 %v299
      %820 = vmatpush.msra.mxu0 %v295
      %821 = vmatpush.msra.mxu0 %v291
      %822 = vmatpush.msra.mxu0 %v287
      %823 = vmatpush.msra.mxu0 %v283
      %824 = vmatpush.msra.mxu0 %v279
      %825 = vmatmul.f32.gmra.mxu0 %v677
      %v826 = vpop.f32.mrf.mxu0
      %v827 = vadd.f32 %v665, %v826
      %828 = vdwg.mxu0
      %829 = vmatpush.msra.mxu0 %v403
      %830 = vmatpush.msra.mxu0 %v399
      %831 = vmatpush.msra.mxu0 %v395
      %832 = vmatpush.msra.mxu0 %v391
      %833 = vmatpush.msra.mxu0 %v387
      %834 = vmatpush.msra.mxu0 %v383
      %835 = vmatpush.msra.mxu0 %v379
      %836 = vmatpush.msra.mxu0 %v375
      %837 = vmatpush.msra.mxu0 %v371
      %838 = vmatpush.msra.mxu0 %v367
      %839 = vmatpush.msra.mxu0 %v363
      %840 = vmatpush.msra.mxu0 %v359
      %841 = vmatpush.msra.mxu0 %v355
      %842 = vmatpush.msra.mxu0 %v351
      %843 = vmatpush.msra.mxu0 %v347
      %844 = vmatpush.msra.mxu0 %v343
      %845 = vmatmul.f32.gmra.mxu0 %v678
      %v846 = vpop.f32.mrf.mxu0
      %v847 = vadd.f32 %v827, %v846
      %848 = vdwg.mxu0
      %849 = vmatpush.msra.mxu0 %v467
      %850 = vmatpush.msra.mxu0 %v463
      %851 = vmatpush.msra.mxu0 %v459
      %852 = vmatpush.msra.mxu0 %v455
      %853 = vmatpush.msra.mxu0 %v451
      %854 = vmatpush.msra.mxu0 %v447
      %855 = vmatpush.msra.mxu0 %v443
      %856 = vmatpush.msra.mxu0 %v439
      %857 = vmatpush.msra.mxu0 %v435
      %858 = vmatpush.msra.mxu0 %v431
      %859 = vmatpush.msra.mxu0 %v427
      %860 = vmatpush.msra.mxu0 %v423
      %861 = vmatpush.msra.mxu0 %v419
      %862 = vmatpush.msra.mxu0 %v415
      %863 = vmatpush.msra.mxu0 %v411
      %864 = vmatpush.msra.mxu0 %v407
      %865 = vmatmul.f32.gmra.mxu0 %v679
      %v866 = vpop.f32.mrf.mxu0
      %v867 = vadd.f32 %v847, %v866
      %868 = vdwg.mxu0
      %869 = vmatpush.msra.mxu0 %v531
      %870 = vmatpush.msra.mxu0 %v527
      %871 = vmatpush.msra.mxu0 %v523
      %872 = vmatpush.msra.mxu0 %v519
      %873 = vmatpush.msra.mxu0 %v515
      %874 = vmatpush.msra.mxu0 %v511
      %875 = vmatpush.msra.mxu0 %v507
      %876 = vmatpush.msra.mxu0 %v503
      %877 = vmatpush.msra.mxu0 %v499
      %878 = vmatpush.msra.mxu0 %v495
      %879 = vmatpush.msra.mxu0 %v491
      %880 = vmatpush.msra.mxu0 %v487
      %881 = vmatpush.msra.mxu0 %v483
      %882 = vmatpush.msra.mxu0 %v479
      %883 = vmatpush.msra.mxu0 %v475
      %884 = vmatpush.msra.mxu0 %v471
      %885 = vmatmul.f32.gmra.mxu0 %v680
      %v886 = vpop.f32.mrf.mxu0
      %v887 = vadd.f32 %v867, %v886
      %888 = vdwg.mxu0
      %889 = vmatpush.msra.mxu0 %v595
      %890 = vmatpush.msra.mxu0 %v591
      %891 = vmatpush.msra.mxu0 %v587
      %892 = vmatpush.msra.mxu0 %v583
      %893 = vmatpush.msra.mxu0 %v579
      %894 = vmatpush.msra.mxu0 %v575
      %895 = vmatpush.msra.mxu0 %v571
      %896 = vmatpush.msra.mxu0 %v567
      %897 = vmatpush.msra.mxu0 %v563
      %898 = vmatpush.msra.mxu0 %v559
      %899 = vmatpush.msra.mxu0 %v555
      %900 = vmatpush.msra.mxu0 %v551
      %901 = vmatpush.msra.mxu0 %v547
      %902 = vmatpush.msra.mxu0 %v543
      %903 = vmatpush.msra.mxu0 %v539
      %904 = vmatpush.msra.mxu0 %v535
      %905 = vmatmul.f32.gmra.mxu0 %v681
      %v906 = vpop.f32.mrf.mxu0
      %v907 = vadd.f32 %v887, %v906
      %908 = vdwg.mxu0
      %909 = vmatpush.msra.mxu0 %v659
      %910 = vmatpush.msra.mxu0 %v655
      %911 = vmatpush.msra.mxu0 %v651
      %912 = vmatpush.msra.mxu0 %v647
      %913 = vmatpush.msra.mxu0 %v643
      %914 = vmatpush.msra.mxu0 %v639
      %915 = vmatpush.msra.mxu0 %v635
      %916 = vmatpush.msra.mxu0 %v631
      %917 = vmatpush.msra.mxu0 %v627
      %918 = vmatpush.msra.mxu0 %v623
      %919 = vmatpush.msra.mxu0 %v619
      %920 = vmatpush.msra.mxu0 %v615
      %921 = vmatpush.msra.mxu0 %v611
      %922 = vmatpush.msra.mxu0 %v607
      %923 = vmatpush.msra.mxu0 %v603
      %924 = vmatpush.msra.mxu0 %v599
      %925 = vmatmul.f32.gmra.mxu0 %v682
      %v926 = vpop.f32.mrf.mxu0
      %v927 = vadd.f32 %v907, %v926
      %928 = vdwg.mxu0
      %929 = vmatpush.msra.mxu0 %v340
      %930 = vmatpush.msra.mxu0 %v336
      %931 = vmatpush.msra.mxu0 %v332
      %932 = vmatpush.msra.mxu0 %v328
      %933 = vmatpush.msra.mxu0 %v324
      %934 = vmatpush.msra.mxu0 %v320
      %935 = vmatpush.msra.mxu0 %v316
      %936 = vmatpush.msra.mxu0 %v312
      %937 = vmatpush.msra.mxu0 %v308
      %938 = vmatpush.msra.mxu0 %v304
      %939 = vmatpush.msra.mxu0 %v300
      %940 = vmatpush.msra.mxu0 %v296
      %941 = vmatpush.msra.mxu0 %v292
      %942 = vmatpush.msra.mxu0 %v288
      %943 = vmatpush.msra.mxu0 %v284
      %944 = vmatpush.msra.mxu0 %v280
      %945 = vmatmul.f32.gmra.mxu0 %v677
      %v946 = vpop.f32.mrf.mxu0
      %v947 = vadd.f32 %v666, %v946
      %948 = vdwg.mxu0
      %949 = vmatpush.msra.mxu0 %v404
      %950 = vmatpush.msra.mxu0 %v400
      %951 = vmatpush.msra.mxu0 %v396
      %952 = vmatpush.msra.mxu0 %v392
      %953 = vmatpush.msra.mxu0 %v388
      %954 = vmatpush.msra.mxu0 %v384
      %955 = vmatpush.msra.mxu0 %v380
      %956 = vmatpush.msra.mxu0 %v376
      %957 = vmatpush.msra.mxu0 %v372
      %958 = vmatpush.msra.mxu0 %v368
      %959 = vmatpush.msra.mxu0 %v364
      %960 = vmatpush.msra.mxu0 %v360
      %961 = vmatpush.msra.mxu0 %v356
      %962 = vmatpush.msra.mxu0 %v352
      %963 = vmatpush.msra.mxu0 %v348
      %964 = vmatpush.msra.mxu0 %v344
      %965 = vmatmul.f32.gmra.mxu0 %v678
      %v966 = vpop.f32.mrf.mxu0
      %v967 = vadd.f32 %v947, %v966
      %968 = vdwg.mxu0
      %969 = vmatpush.msra.mxu0 %v468
      %970 = vmatpush.msra.mxu0 %v464
      %971 = vmatpush.msra.mxu0 %v460
      %972 = vmatpush.msra.mxu0 %v456
      %973 = vmatpush.msra.mxu0 %v452
      %974 = vmatpush.msra.mxu0 %v448
      %975 = vmatpush.msra.mxu0 %v444
      %976 = vmatpush.msra.mxu0 %v440
      %977 = vmatpush.msra.mxu0 %v436
      %978 = vmatpush.msra.mxu0 %v432
      %979 = vmatpush.msra.mxu0 %v428
      %980 = vmatpush.msra.mxu0 %v424
      %981 = vmatpush.msra.mxu0 %v420
      %982 = vmatpush.msra.mxu0 %v416
      %983 = vmatpush.msra.mxu0 %v412
      %984 = vmatpush.msra.mxu0 %v408
      %985 = vmatmul.f32.gmra.mxu0 %v679
      %v986 = vpop.f32.mrf.mxu0
      %v987 = vadd.f32 %v967, %v986
      %988 = vdwg.mxu0
      %989 = vmatpush.msra.mxu0 %v532
      %990 = vmatpush.msra.mxu0 %v528
      %991 = vmatpush.msra.mxu0 %v524
      %992 = vmatpush.msra.mxu0 %v520
      %993 = vmatpush.msra.mxu0 %v516
      %994 = vmatpush.msra.mxu0 %v512
      %995 = vmatpush.msra.mxu0 %v508
      %996 = vmatpush.msra.mxu0 %v504
      %997 = vmatpush.msra.mxu0 %v500
      %998 = vmatpush.msra.mxu0 %v496
      %999 = vmatpush.msra.mxu0 %v492
      %1000 = vmatpush.msra.mxu0 %v488
      %1001 = vmatpush.msra.mxu0 %v484
      %1002 = vmatpush.msra.mxu0 %v480
      %1003 = vmatpush.msra.mxu0 %v476
      %1004 = vmatpush.msra.mxu0 %v472
      %1005 = vmatmul.f32.gmra.mxu0 %v680
      %v1006 = vpop.f32.mrf.mxu0
      %v1007 = vadd.f32 %v987, %v1006
      %1008 = vdwg.mxu0
      %1009 = vmatpush.msra.mxu0 %v596
      %1010 = vmatpush.msra.mxu0 %v592
      %1011 = vmatpush.msra.mxu0 %v588
      %1012 = vmatpush.msra.mxu0 %v584
      %1013 = vmatpush.msra.mxu0 %v580
      %1014 = vmatpush.msra.mxu0 %v576
      %1015 = vmatpush.msra.mxu0 %v572
      %1016 = vmatpush.msra.mxu0 %v568
      %1017 = vmatpush.msra.mxu0 %v564
      %1018 = vmatpush.msra.mxu0 %v560
      %1019 = vmatpush.msra.mxu0 %v556
      %1020 = vmatpush.msra.mxu0 %v552
      %1021 = vmatpush.msra.mxu0 %v548
      %1022 = vmatpush.msra.mxu0 %v544
      %1023 = vmatpush.msra.mxu0 %v540
      %1024 = vmatpush.msra.mxu0 %v536
      %1025 = vmatmul.f32.gmra.mxu0 %v681
      %v1026 = vpop.f32.mrf.mxu0
      %v1027 = vadd.f32 %v1007, %v1026
      %1028 = vdwg.mxu0
      %1029 = vmatpush.msra.mxu0 %v660
      %1030 = vmatpush.msra.mxu0 %v656
      %1031 = vmatpush.msra.mxu0 %v652
      %1032 = vmatpush.msra.mxu0 %v648
      %1033 = vmatpush.msra.mxu0 %v644
      %1034 = vmatpush.msra.mxu0 %v640
      %1035 = vmatpush.msra.mxu0 %v636
      %1036 = vmatpush.msra.mxu0 %v632
      %1037 = vmatpush.msra.mxu0 %v628
      %1038 = vmatpush.msra.mxu0 %v624
      %1039 = vmatpush.msra.mxu0 %v620
      %1040 = vmatpush.msra.mxu0 %v616
      %1041 = vmatpush.msra.mxu0 %v612
      %1042 = vmatpush.msra.mxu0 %v608
      %1043 = vmatpush.msra.mxu0 %v604
      %1044 = vmatpush.msra.mxu0 %v600
      %1045 = vmatmul.f32.gmra.mxu0 %v682
      %v1046 = vpop.f32.mrf.mxu0
      %v1047 = vadd.f32 %v1027, %v1046
      %1048 = vdwg.mxu0
      %1049 = vmatpush.msra.mxu0 %v341
      %1050 = vmatpush.msra.mxu0 %v337
      %1051 = vmatpush.msra.mxu0 %v333
      %1052 = vmatpush.msra.mxu0 %v329
      %1053 = vmatpush.msra.mxu0 %v325
      %1054 = vmatpush.msra.mxu0 %v321
      %1055 = vmatpush.msra.mxu0 %v317
      %1056 = vmatpush.msra.mxu0 %v313
      %1057 = vmatpush.msra.mxu0 %v309
      %1058 = vmatpush.msra.mxu0 %v305
      %1059 = vmatpush.msra.mxu0 %v301
      %1060 = vmatpush.msra.mxu0 %v297
      %1061 = vmatpush.msra.mxu0 %v293
      %1062 = vmatpush.msra.mxu0 %v289
      %1063 = vmatpush.msra.mxu0 %v285
      %1064 = vmatpush.msra.mxu0 %v281
      %1065 = vmatmul.f32.gmra.mxu0 %v677
      %v1066 = vpop.f32.mrf.mxu0
      %v1067 = vadd.f32 %v667, %v1066
      %1068 = vdwg.mxu0
      %1069 = vmatpush.msra.mxu0 %v405
      %1070 = vmatpush.msra.mxu0 %v401
      %1071 = vmatpush.msra.mxu0 %v397
      %1072 = vmatpush.msra.mxu0 %v393
      %1073 = vmatpush.msra.mxu0 %v389
      %1074 = vmatpush.msra.mxu0 %v385
      %1075 = vmatpush.msra.mxu0 %v381
      %1076 = vmatpush.msra.mxu0 %v377
      %1077 = vmatpush.msra.mxu0 %v373
      %1078 = vmatpush.msra.mxu0 %v369
      %1079 = vmatpush.msra.mxu0 %v365
      %1080 = vmatpush.msra.mxu0 %v361
      %1081 = vmatpush.msra.mxu0 %v357
      %1082 = vmatpush.msra.mxu0 %v353
      %1083 = vmatpush.msra.mxu0 %v349
      %1084 = vmatpush.msra.mxu0 %v345
      %1085 = vmatmul.f32.gmra.mxu0 %v678
      %v1086 = vpop.f32.mrf.mxu0
      %v1087 = vadd.f32 %v1067, %v1086
      %1088 = vdwg.mxu0
      %1089 = vmatpush.msra.mxu0 %v469
      %1090 = vmatpush.msra.mxu0 %v465
      %1091 = vmatpush.msra.mxu0 %v461
      %1092 = vmatpush.msra.mxu0 %v457
      %1093 = vmatpush.msra.mxu0 %v453
      %1094 = vmatpush.msra.mxu0 %v449
      %1095 = vmatpush.msra.mxu0 %v445
      %1096 = vmatpush.msra.mxu0 %v441
      %1097 = vmatpush.msra.mxu0 %v437
      %1098 = vmatpush.msra.mxu0 %v433
      %1099 = vmatpush.msra.mxu0 %v429
      %1100 = vmatpush.msra.mxu0 %v425
      %1101 = vmatpush.msra.mxu0 %v421
      %1102 = vmatpush.msra.mxu0 %v417
      %1103 = vmatpush.msra.mxu0 %v413
      %1104 = vmatpush.msra.mxu0 %v409
      %1105 = vmatmul.f32.gmra.mxu0 %v679
      %v1106 = vpop.f32.mrf.mxu0
      %v1107 = vadd.f32 %v1087, %v1106
      %1108 = vdwg.mxu0
      %1109 = vmatpush.msra.mxu0 %v533
      %1110 = vmatpush.msra.mxu0 %v529
      %1111 = vmatpush.msra.mxu0 %v525
      %1112 = vmatpush.msra.mxu0 %v521
      %1113 = vmatpush.msra.mxu0 %v517
      %1114 = vmatpush.msra.mxu0 %v513
      %1115 = vmatpush.msra.mxu0 %v509
      %1116 = vmatpush.msra.mxu0 %v505
      %1117 = vmatpush.msra.mxu0 %v501
      %1118 = vmatpush.msra.mxu0 %v497
      %1119 = vmatpush.msra.mxu0 %v493
      %1120 = vmatpush.msra.mxu0 %v489
      %1121 = vmatpush.msra.mxu0 %v485
      %1122 = vmatpush.msra.mxu0 %v481
      %1123 = vmatpush.msra.mxu0 %v477
      %1124 = vmatpush.msra.mxu0 %v473
      %1125 = vmatmul.f32.gmra.mxu0 %v680
      %v1126 = vpop.f32.mrf.mxu0
      %v1127 = vadd.f32 %v1107, %v1126
      %1128 = vdwg.mxu0
      %1129 = vmatpush.msra.mxu0 %v597
      %1130 = vmatpush.msra.mxu0 %v593
      %1131 = vmatpush.msra.mxu0 %v589
      %1132 = vmatpush.msra.mxu0 %v585
      %1133 = vmatpush.msra.mxu0 %v581
      %1134 = vmatpush.msra.mxu0 %v577
      %1135 = vmatpush.msra.mxu0 %v573
      %1136 = vmatpush.msra.mxu0 %v569
      %1137 = vmatpush.msra.mxu0 %v565
      %1138 = vmatpush.msra.mxu0 %v561
      %1139 = vmatpush.msra.mxu0 %v557
      %1140 = vmatpush.msra.mxu0 %v553
      %1141 = vmatpush.msra.mxu0 %v549
      %1142 = vmatpush.msra.mxu0 %v545
      %1143 = vmatpush.msra.mxu0 %v541
      %1144 = vmatpush.msra.mxu0 %v537
      %1145 = vmatmul.f32.gmra.mxu0 %v681
      %v1146 = vpop.f32.mrf.mxu0
      %v1147 = vadd.f32 %v1127, %v1146
      %1148 = vdwg.mxu0
      %1149 = vmatpush.msra.mxu0 %v661
      %1150 = vmatpush.msra.mxu0 %v657
      %1151 = vmatpush.msra.mxu0 %v653
      %1152 = vmatpush.msra.mxu0 %v649
      %1153 = vmatpush.msra.mxu0 %v645
      %1154 = vmatpush.msra.mxu0 %v641
      %1155 = vmatpush.msra.mxu0 %v637
      %1156 = vmatpush.msra.mxu0 %v633
      %1157 = vmatpush.msra.mxu0 %v629
      %1158 = vmatpush.msra.mxu0 %v625
      %1159 = vmatpush.msra.mxu0 %v621
      %1160 = vmatpush.msra.mxu0 %v617
      %1161 = vmatpush.msra.mxu0 %v613
      %1162 = vmatpush.msra.mxu0 %v609
      %1163 = vmatpush.msra.mxu0 %v605
      %1164 = vmatpush.msra.mxu0 %v601
      %1165 = vmatmul.f32.gmra.mxu0 %v682
      %v1166 = vpop.f32.mrf.mxu0
      %v1167 = vadd.f32 %v1147, %v1166
      %1168 = vdwg.mxu0
      %v1169 = vtanh.pop %v807
      %v1170 = vtanh.pop %v927
      %v1171 = vtanh.pop %v1047
      %v1172 = vtanh.pop %v1167
      %v1177 = vrot.slane %v1170, 6
      %v1178 = vrot.slane %v1171, 4
      %v1179 = vrot.slane %v1172, 2
      %v1180 = vsel %vm209, %v1169, %v1177
      %v1181 = vsel %vm211, %v1178, %v1179
      %v1182 = vsel %vm213, %v1180, %v1181
      %1184 = vst [vmem:[#allocation9] sm:$0xff] %v1182
    $region41: #{tpu_custom_call.1} parent=1 // pred_fallthru
      _
    // Predicated region
    $region42: #{tpu_custom_call.1} parent=1 // pred_check
      _
    $region43: #{tpu_custom_call.1} parent=1 // pred_check_branch
      %1186 = sbr.rel (0) target = $region45
    $region44: #{tpu_custom_call.1} parent=1 // pred_region
      %1188 = vsyncadd [#allocation5], 0
      %s1190 = sshll.u32 [#allocation9], 4
      %s1191 = int_to_ptr.vmem [resolvable:$true] %s1190
      %s1192 = sshll.u32 %s5, 4
      %s1193 = int_to_ptr.hbm [resolvable:$true] %s1192
      %1195 = dma.vmem_to_hbm [thread:$0]  %s1191, 128, %s1193, [#allocation5]
    $region45: #{tpu_custom_call.1} parent=1 // pred_fallthru
      _
    // Predicated region
    $region46: #{tpu_custom_call.1} parent=1 // pred_check
      _
    $region47: #{tpu_custom_call.1} parent=1 // pred_check_branch
      %1197 = sbr.rel (0) target = $region49
    $region48: #{tpu_custom_call.1} parent=1 // pred_region
      %1199 = dma.done [#allocation5], 128
    $region49: #{tpu_custom_call.1} parent=1 // pred_fallthru
      _
    %1200 = vsyncpa [#allocation4], 1
    %1201 = vsyncpa [#allocation7], 1
    %1202 = vsyncpa [#allocation5], 1

</llo_original>
